<compile_context>
chip_gen: v6e
topology: v6e:2x2x1
jax: 0.10.0
libtpu: 0.0.40
codegen_flags: <defaults>
</compile_context>

<pallas_src>
import functools
import numpy as np
import jax
import jax.numpy as jnp
from jax import lax
from jax.experimental import pallas as pl
from jax.experimental.pallas import tpu as pltpu

BN_EPS = 1e-5


def _round_up(x, m):
    return ((x + m - 1) // m) * m


# ------------------------------------ fused kernel ------------------------------------
def _fused_daspp_branch_kernel(x_ref, w1_ref, b1_ref, w2_ref, b2_ref, mask_ref,
                               o_ref, y1_ref, patch_ref,
                               *, W, d, MB, P, num_bands, lane_aligned):
    """Fused (1x1 conv + BN + ReLU) -> (dilated 3x3 conv + BN + ReLU), channels-first.

    One grid step = one (sample, H-band) pair.  M = H*W, MB = band_rows*W.

    x_ref:     (Cin, M)        full flattened sample (resident across the band axis)
    w1_ref:    (Cmid, Cin)     1x1 weights, BN scale folded in
    b1_ref:    (Cmid, 1)       BN shift, stage 1 (f32)
    w2_ref:    (Cout, 9*Cmid)  3x3 weights, tap-major K, BN scale folded in
    b2_ref:    (Cout, 1)       BN shift, stage 2 (f32)
    mask_ref:  (2, MB)         column-validity masks for kx offsets {-d, +d}
    o_ref:     (Cout, MB)      output rows of this band (f32)
    y1_ref:    (Cmid, MB+2P)   scratch: banded stage-1 output with zeroed halo margins
    patch_ref: (9*Cmid, MB)    scratch: im2col patch of this band
    """
    Cmid = y1_ref.shape[0]
    b = pl.program_id(1)
    base = b * MB
    if lane_aligned:
        base = pl.multiple_of(base, 128)     # MB % 128 == 0 -> lane-aligned dynamic slices
    halo = d * W                             # flattened length of the d-row vertical halo

    w1 = w1_ref[...]
    b1 = b1_ref[...]

    # ---- stage 1 (banded): zero only the margins, then write interior + vertical halos ----
    margin = jnp.zeros((Cmid, P), dtype=y1_ref.dtype)
    y1_ref[:, :P] = margin                   # P is a multiple of 128 -> unmasked stores
    y1_ref[:, P + MB:] = margin

    y1 = jnp.dot(w1, x_ref[:, pl.ds(base, MB)], preferred_element_type=jnp.float32)
    y1_ref[:, P:P + MB] = jnp.maximum(y1 + b1, 0.0).astype(y1_ref.dtype)

    if num_bands > 1:                        # recompute the d-row halos from adjacent bands
        @pl.when(b > 0)
        def _():
            yt = jnp.dot(w1, x_ref[:, pl.ds(base - halo, halo)],
                         preferred_element_type=jnp.float32)
            y1_ref[:, P - halo:P] = jnp.maximum(yt + b1, 0.0).astype(y1_ref.dtype)

        @pl.when(b < num_bands - 1)
        def _():
            yb = jnp.dot(w1, x_ref[:, pl.ds(base + MB, halo)],
                         preferred_element_type=jnp.float32)
            y1_ref[:, P + MB:P + MB + halo] = jnp.maximum(yb + b1, 0.0).astype(y1_ref.dtype)

    # ---- stage 2: per-tap stores into the im2col patch, then one K=9*Cmid matmul ----
    mask_l = mask_ref[0:1, :]                # kx offset -d
    mask_r = mask_ref[1:2, :]                # kx offset +d
    for ky in range(3):
        for kx in range(3):
            t = ky * 3 + kx
            delta = (ky - 1) * d * W + (kx - 1) * d        # static flattened tap offset
            tap = y1_ref[:, P + delta:P + delta + MB]      # static slice into the band scratch
            if kx == 0:
                tap = tap * mask_l
            elif kx == 2:
                tap = tap * mask_r
            patch_ref[t * Cmid:(t + 1) * Cmid, :] = tap

    y2 = jnp.dot(w2_ref[...], patch_ref[...], preferred_element_type=jnp.float32)
    o_ref[...] = jnp.maximum(y2 + b2_ref[...], 0.0).astype(o_ref.dtype)


# ------------------------------------ wrapper ------------------------------------
def _vmem_capacity_bytes():
    """Physical VMEM per TensorCore; conservative fallback if the query is unavailable."""
    try:
        info = pltpu.get_tpu_info()
        for name in ("vmem_capacity_bytes", "vmem_size_bytes", "vmem_bytes"):
            v = getattr(info, name, None)
            if v:
                return int(v)
    except Exception:
        pass
    return 64 * 1024 * 1024      # v7x per-TC size; safe lower bound for v5e/v6e as well


def _band_vmem_bytes(band_rows, *, H, W, Cin, Cmid, Cout, P, itemsize):
    """Per-grid-step VMEM footprint estimate for a given band height."""
    M, MB = H * W, band_rows * W
    return (itemsize * (2 * Cin * M                        # full-sample input block (dbl-buffered)
                        + Cmid * (MB + 2 * P)              # stage-1 band scratch
                        + 9 * Cmid * MB                    # im2col patch scratch
                        + Cmid * Cin + Cout * 9 * Cmid + 2 * MB)   # weights + masks
            + 4 * (2 * Cout * MB + Cmid + Cout))           # f32 output block (dbl-buffered) + shifts


def _choose_band_rows(H, W, d, Cin, Cmid, Cout, P, itemsize, budget_bytes):
    """Largest divisor of H whose per-step footprint fits the budget (lane-aligned if banded)."""
    divisors = [hb for hb in range(1, H + 1) if H % hb == 0]
    for hb in sorted(divisors, reverse=True):
        ok_shape = (hb == H) or ((hb * W) % 128 == 0 and hb >= d)
        if ok_shape and _band_vmem_bytes(hb, H=H, W=W, Cin=Cin, Cmid=Cmid, Cout=Cout,
                                         P=P, itemsize=itemsize) <= budget_bytes:
            return hb
    for hb in sorted(divisors):
        if (hb * W) % 128 == 0 and hb >= d:
            return hb
    return H


def daspp_conv_branch(x_nchw, params, dilation, band_rows=None, use_bf16=False):
    """Forward pass of _DASPPConvBranch. x_nchw: (N, Cin, H, W) float32 (NCHW, like PyTorch)."""
    N, Cin, H, W = x_nchw.shape
    d = int(dilation)
    Cmid = params["w1"].shape[1]
    Cout = params["w2"].shape[-1]
    M = H * W
    cdt = jnp.bfloat16 if use_bf16 else jnp.float32
    itemsize = jnp.dtype(cdt).itemsize

    # Lane-aligned halo margin (>= d*(W+1), the largest |flattened tap offset|).
    P = _round_up(d * (W + 1), 128)

    # Per-generation VMEM budget and band selection (fewest, largest, lane-dense bands).
    phys = _vmem_capacity_bytes()
    cap = max(32 * 1024 * 1024, min(phys - 12 * 1024 * 1024, 100 * 1024 * 1024))
    if band_rows is None:
        band_rows = _choose_band_rows(H, W, d, Cin, Cmid, Cout, P, itemsize,
                                      budget_bytes=int(0.6 * cap))
    if H % band_rows != 0:
        band_rows = H
    MB = band_rows * W
    num_bands = H // band_rows
    # When banded: bands must be >= d rows (halo comes from one neighbor) and lane-dense.
    if num_bands > 1 and (MB % 128 != 0 or band_rows < d):
        band_rows, MB, num_bands = H, M, 1
    lane_aligned = (MB % 128 == 0)

    # Fold BN scale into the conv weights (inference-mode BN); only the shift stays in-kernel.
    w1k = jnp.transpose(params["w1"] * params["scale1"][None, :]).astype(cdt)       # (Cmid, Cin)
    b1k = params["shift1"].reshape(Cmid, 1).astype(jnp.float32)
    w2k = jnp.transpose(params["w2"], (3, 0, 1, 2)).reshape(Cout, 9 * Cmid)         # tap-major K
    w2k = (w2k * params["scale2"][:, None]).astype(cdt)
    b2k = params["shift2"].reshape(Cout, 1).astype(jnp.float32)

    # Column-validity masks for horizontal tap offsets {-d, +d}; identical for every band
    # because band boundaries are row-aligned (MB is a multiple of W).
    col = np.arange(MB) % W
    mask = np.stack([col >= d, col < W - d], axis=0).astype(np.float32)
    mask = jnp.asarray(mask, dtype=cdt)

    # NCHW flattens directly to channels-first (spatial on the lane axis); no transposes.
    x2 = x_nchw.reshape(N, Cin, M).astype(cdt)

    # Right-size the scoped VMEM limit from the actual footprint, with compiler headroom.
    need = _band_vmem_bytes(band_rows, H=H, W=W, Cin=Cin, Cmid=Cmid, Cout=Cout,
                            P=P, itemsize=itemsize)
    vmem_limit = int(min(cap, max(32 * 1024 * 1024, 2 * need)))

    kern = functools.partial(_fused_daspp_branch_kernel, W=W, d=d, MB=MB, P=P,
                             num_bands=num_bands, lane_aligned=lane_aligned)
    out = pl.pallas_call(
        kern,
        out_shape=jax.ShapeDtypeStruct((N, Cout, M), jnp.float32),
        grid_spec=pltpu.PrefetchScalarGridSpec(
            num_scalar_prefetch=0,
            grid=(N, num_bands),
            in_specs=[
                # TODO(synk): for very large images also band the input block to (Cin, MB+halo)
                # instead of keeping the full (Cin, M) sample resident (v7x VMEM at high res).
                pl.BlockSpec((None, Cin, M), lambda n, b: (n, 0, 0)),
                pl.BlockSpec((Cmid, Cin), lambda n, b: (0, 0)),
                pl.BlockSpec((Cmid, 1), lambda n, b: (0, 0)),
                pl.BlockSpec((Cout, 9 * Cmid), lambda n, b: (0, 0)),
                pl.BlockSpec((Cout, 1), lambda n, b: (0, 0)),
                pl.BlockSpec((2, MB), lambda n, b: (0, 0)),
            ],
            out_specs=pl.BlockSpec((None, Cout, MB), lambda n, b: (n, 0, b)),
            scratch_shapes=[
                pltpu.VMEM((Cmid, MB + 2 * P), cdt),       # banded stage-1 output + halos
                pltpu.VMEM((9 * Cmid, MB), cdt),           # im2col patch
            ],
        ),
        compiler_params=pltpu.CompilerParams(
            # Every (sample, band) step is independent -> both grid axes are parallel
            # (v7x megacore can split the band axis even when N == 1).
            dimension_semantics=("parallel", "parallel"),
            vmem_limit_bytes=vmem_limit,
        ),
    )(x2, w1k, b1k, w2k, b2k, mask)
    return out.reshape(N, Cout, H, W)


# ------------------------------------ params ------------------------------------
def make_params(key, in_ch, inter_ch, out_ch):
    """Deterministic synthetic weights + folded BatchNorm (inference) affine params."""
    k1, k2, k3, k4, k5, k6 = jax.random.split(key, 6)
    w1 = 0.1 * jax.random.normal(k1, (in_ch, inter_ch), jnp.float32)          # 1x1 conv, (Cin, Cmid)
    w2 = 0.1 * jax.random.normal(k2, (3, 3, inter_ch, out_ch), jnp.float32)   # 3x3 conv, HWIO

    gamma1 = 1.0 + 0.1 * jax.random.normal(k3, (inter_ch,), jnp.float32)
    beta1 = 0.05 * jax.random.normal(k4, (inter_ch,), jnp.float32)
    mean1 = 0.02 * jnp.arange(inter_ch, dtype=jnp.float32)
    var1 = 1.0 + 0.05 * jnp.arange(inter_ch, dtype=jnp.float32)
    scale1 = gamma1 / jnp.sqrt(var1 + BN_EPS)
    shift1 = beta1 - mean1 * scale1

    gamma2 = 1.0 + 0.1 * jax.random.normal(k5, (out_ch,), jnp.float32)
    beta2 = 0.05 * jax.random.normal(k6, (out_ch,), jnp.float32)
    mean2 = 0.01 * jnp.arange(out_ch, dtype=jnp.float32)
    var2 = 1.0 + 0.03 * jnp.arange(out_ch, dtype=jnp.float32)
    scale2 = gamma2 / jnp.sqrt(var2 + BN_EPS)
    shift2 = beta2 - mean2 * scale2

    return dict(w1=w1, scale1=scale1, shift1=shift1,
                w2=w2, scale2=scale2, shift2=shift2)


# ------------------------------------ pure-JAX reference ------------------------------------
def ref_forward(x_nchw, params, dilation):
    x = jnp.transpose(x_nchw, (0, 2, 3, 1))
    y = jnp.einsum("nhwc,co->nhwo", x, params["w1"])
    y = jnp.maximum(y * params["scale1"] + params["shift1"], 0.0)
    d = int(dilation)
    y2 = lax.conv_general_dilated(
        y, params["w2"], window_strides=(1, 1),
        padding=((d, d), (d, d)), rhs_dilation=(d, d),
        dimension_numbers=("NHWC", "HWIO", "NHWC"))
    y2 = jnp.maximum(y2 * params["scale2"] + params["shift2"], 0.0)
    return jnp.transpose(y2, (0, 3, 1, 2))


if __name__ == "__main__":
    # Small shapes consistent with the module: in_channel=16 -> inter=in//2=8 -> out=8.
    N, Cin, H, W = 2, 16, 16, 16
    inter_ch, out_ch, dilation = Cin // 2, 8, 2

    key = jax.random.PRNGKey(0)
    kx_, kp = jax.random.split(key)
    x = jax.random.normal(kx_, (N, Cin, H, W), jnp.float32)   # NCHW input, like PyTorch
    params = make_params(kp, Cin, inter_ch, out_ch)
    ref = ref_forward(x, params, dilation)

    # 1) Auto band selection -> one full-image band per sample here (grid = (N, 1)).
    out = jax.block_until_ready(daspp_conv_branch(x, params, dilation))
    assert out.shape == (N, out_ch, H, W)
    assert jnp.allclose(out, ref, rtol=1e-3, atol=1e-3), "f32 single-band mismatch"

    # 2) Forced multi-band config (grid = (N, 2)) to exercise the per-band halo recompute.
    out_b = jax.block_until_ready(daspp_conv_branch(x, params, dilation, band_rows=8))
    assert jnp.allclose(out_b, ref, rtol=1e-3, atol=1e-3), "f32 multi-band mismatch"

    # 3) bf16 matmul operands (f32 accumulation + f32 epilogue), looser tolerance.
    out_bf = jax.block_until_ready(
        daspp_conv_branch(x, params, dilation, band_rows=8, use_bf16=True))
    assert jnp.allclose(out_bf, ref, rtol=5e-2, atol=5e-2), "bf16 mismatch"

    print("KERNEL_OK")
</pallas_src>

<mosaic_0001>
module attributes {stable_mosaic.version = 11 : i64} {
  func.func @_fused_daspp_branch_kernel(%arg0: i32, %arg1: i32, %arg2: memref<1x16x256xf32, #tpu.memory_space<vmem>>, %arg3: memref<8x16xf32, #tpu.memory_space<vmem>>, %arg4: memref<8x1xf32, #tpu.memory_space<vmem>>, %arg5: memref<8x72xf32, #tpu.memory_space<vmem>>, %arg6: memref<8x1xf32, #tpu.memory_space<vmem>>, %arg7: memref<2x256xf32, #tpu.memory_space<vmem>>, %arg8: memref<1x8x256xf32, #tpu.memory_space<vmem>>, %arg9: memref<8x512xf32, #tpu.memory_space<vmem>>, %arg10: memref<72x256xf32, #tpu.memory_space<vmem>>) attributes {dimension_semantics = [#tpu.dimension_semantics<parallel>, #tpu.dimension_semantics<parallel>], iteration_bounds = array<i64: 2, 1>, scalar_prefetch = 0 : i64, scratch_operands = 2 : i64, tpu.core_type = #tpu.core_type<tc>, window_params = [{transform_indices = @transform_0, window_bounds = array<i64: 1, 16, 256>}, {pipeline_mode = #tpu.pipeline_mode<synchronous>, transform_indices = @transform_1, window_bounds = array<i64: 8, 16>}, {pipeline_mode = #tpu.pipeline_mode<synchronous>, transform_indices = @transform_2, window_bounds = array<i64: 8, 1>}, {pipeline_mode = #tpu.pipeline_mode<synchronous>, transform_indices = @transform_3, window_bounds = array<i64: 8, 72>}, {pipeline_mode = #tpu.pipeline_mode<synchronous>, transform_indices = @transform_4, window_bounds = array<i64: 8, 1>}, {pipeline_mode = #tpu.pipeline_mode<synchronous>, transform_indices = @transform_5, window_bounds = array<i64: 2, 256>}, {transform_indices = @transform_6, window_bounds = array<i64: 1, 8, 256>}]} {
    %c256_i32 = arith.constant 256 : i32
    %0 = arith.muli %arg1, %c256_i32 : i32
    %1 = tpu.assume_multiple %0, 128 : i32
    %c0 = arith.constant 0 : index
    %c0_0 = arith.constant 0 : index
    %2 = vector.load %arg3[%c0, %c0_0] : memref<8x16xf32, #tpu.memory_space<vmem>>, vector<8x16xf32>
    %c0_1 = arith.constant 0 : index
    %c0_2 = arith.constant 0 : index
    %3 = vector.load %arg4[%c0_1, %c0_2] : memref<8x1xf32, #tpu.memory_space<vmem>>, vector<8x1xf32>
    %cst = arith.constant 0.000000e+00 : f32
    %4 = vector.broadcast %cst : f32 to vector<8x128xf32>
    %c0_3 = arith.constant 0 : index
    %c0_4 = arith.constant 0 : index
    %5 = vector.load %arg9[%c0_3, %c0_4] : memref<8x512xf32, #tpu.memory_space<vmem>>, vector<8x128xf32>
    tpu.vector_store %arg9[%c0_3, %c0_4], %4 {strides = array<i32>} : memref<8x512xf32, #tpu.memory_space<vmem>>, vector<8x128xf32>,
    %c0_5 = arith.constant 0 : index
    %c384 = arith.constant 384 : index
    %6 = vector.load %arg9[%c0_5, %c384] : memref<8x512xf32, #tpu.memory_space<vmem>>, vector<8x128xf32>
    tpu.vector_store %arg9[%c0_5, %c384], %4 {strides = array<i32>} : memref<8x512xf32, #tpu.memory_space<vmem>>, vector<8x128xf32>,
    %c0_6 = arith.constant 0 : index
    %c0_7 = arith.constant 0 : index
    %7 = arith.index_cast %1 : i32 to index
    %8 = vector.load %arg2[%c0_6, %c0_7, %7] : memref<1x16x256xf32, #tpu.memory_space<vmem>>, vector<1x16x256xf32>
    %9 = vector.shape_cast %8 : vector<1x16x256xf32> to vector<16x256xf32>
    %cst_8 = arith.constant dense<0.000000e+00> : vector<8x256xf32>
    %10 = tpu.matmul %2, %9, %cst_8 {dimension_numbers = #tpu.dot_dimension_numbers<[1], [0], [0], [1], [0, 0, 1, 1], [], []>} : vector<8x16xf32>, vector<16x256xf32>, vector<8x256xf32> -> vector<8x256xf32>
    %11 = vector.broadcast %3 : vector<8x1xf32> to vector<8x256xf32>
    %12 = arith.addf %10, %11 : vector<8x256xf32>
    %cst_9 = arith.constant 0.000000e+00 : f32
    %13 = vector.broadcast %cst_9 : f32 to vector<8x256xf32>
    %14 = arith.maximumf %12, %13 : vector<8x256xf32>
    %c0_10 = arith.constant 0 : index
    %c128 = arith.constant 128 : index
    %15 = vector.load %arg9[%c0_10, %c128] : memref<8x512xf32, #tpu.memory_space<vmem>>, vector<8x256xf32>
    tpu.vector_store %arg9[%c0_10, %c128], %14 {strides = array<i32>} : memref<8x512xf32, #tpu.memory_space<vmem>>, vector<8x256xf32>,
    %c0_11 = arith.constant 0 : index
    %c0_12 = arith.constant 0 : index
    %16 = vector.load %arg7[%c0_11, %c0_12] : memref<2x256xf32, #tpu.memory_space<vmem>>, vector<1x256xf32>
    %c1 = arith.constant 1 : index
    %c0_13 = arith.constant 0 : index
    %17 = vector.load %arg7[%c1, %c0_13] : memref<2x256xf32, #tpu.memory_space<vmem>>, vector<1x256xf32>
    %c0_14 = arith.constant 0 : index
    %c94 = arith.constant 94 : index
    %18 = vector.load %arg9[%c0_14, %c94] : memref<8x512xf32, #tpu.memory_space<vmem>>, vector<8x256xf32>
    %19 = vector.broadcast %16 : vector<1x256xf32> to vector<8x256xf32>
    %20 = arith.mulf %18, %19 : vector<8x256xf32>
    %c0_15 = arith.constant 0 : index
    %c0_16 = arith.constant 0 : index
    %21 = vector.load %arg10[%c0_15, %c0_16] : memref<72x256xf32, #tpu.memory_space<vmem>>, vector<8x256xf32>
    tpu.vector_store %arg10[%c0_15, %c0_16], %20 {strides = array<i32>} : memref<72x256xf32, #tpu.memory_space<vmem>>, vector<8x256xf32>,
    %c0_17 = arith.constant 0 : index
    %c96 = arith.constant 96 : index
    %22 = vector.load %arg9[%c0_17, %c96] : memref<8x512xf32, #tpu.memory_space<vmem>>, vector<8x256xf32>
    %c8 = arith.constant 8 : index
    %c0_18 = arith.constant 0 : index
    %23 = vector.load %arg10[%c8, %c0_18] : memref<72x256xf32, #tpu.memory_space<vmem>>, vector<8x256xf32>
    tpu.vector_store %arg10[%c8, %c0_18], %22 {strides = array<i32>} : memref<72x256xf32, #tpu.memory_space<vmem>>, vector<8x256xf32>,
    %c0_19 = arith.constant 0 : index
    %c98 = arith.constant 98 : index
    %24 = vector.load %arg9[%c0_19, %c98] : memref<8x512xf32, #tpu.memory_space<vmem>>, vector<8x256xf32>
    %25 = vector.broadcast %17 : vector<1x256xf32> to vector<8x256xf32>
    %26 = arith.mulf %24, %25 : vector<8x256xf32>
    %c16 = arith.constant 16 : index
    %c0_20 = arith.constant 0 : index
    %27 = vector.load %arg10[%c16, %c0_20] : memref<72x256xf32, #tpu.memory_space<vmem>>, vector<8x256xf32>
    tpu.vector_store %arg10[%c16, %c0_20], %26 {strides = array<i32>} : memref<72x256xf32, #tpu.memory_space<vmem>>, vector<8x256xf32>,
    %c0_21 = arith.constant 0 : index
    %c126 = arith.constant 126 : index
    %28 = vector.load %arg9[%c0_21, %c126] : memref<8x512xf32, #tpu.memory_space<vmem>>, vector<8x256xf32>
    %29 = vector.broadcast %16 : vector<1x256xf32> to vector<8x256xf32>
    %30 = arith.mulf %28, %29 : vector<8x256xf32>
    %c24 = arith.constant 24 : index
    %c0_22 = arith.constant 0 : index
    %31 = vector.load %arg10[%c24, %c0_22] : memref<72x256xf32, #tpu.memory_space<vmem>>, vector<8x256xf32>
    tpu.vector_store %arg10[%c24, %c0_22], %30 {strides = array<i32>} : memref<72x256xf32, #tpu.memory_space<vmem>>, vector<8x256xf32>,
    %c0_23 = arith.constant 0 : index
    %c128_24 = arith.constant 128 : index
    %32 = vector.load %arg9[%c0_23, %c128_24] : memref<8x512xf32, #tpu.memory_space<vmem>>, vector<8x256xf32>
    %c32 = arith.constant 32 : index
    %c0_25 = arith.constant 0 : index
    %33 = vector.load %arg10[%c32, %c0_25] : memref<72x256xf32, #tpu.memory_space<vmem>>, vector<8x256xf32>
    tpu.vector_store %arg10[%c32, %c0_25], %32 {strides = array<i32>} : memref<72x256xf32, #tpu.memory_space<vmem>>, vector<8x256xf32>,
    %c0_26 = arith.constant 0 : index
    %c130 = arith.constant 130 : index
    %34 = vector.load %arg9[%c0_26, %c130] : memref<8x512xf32, #tpu.memory_space<vmem>>, vector<8x256xf32>
    %35 = vector.broadcast %17 : vector<1x256xf32> to vector<8x256xf32>
    %36 = arith.mulf %34, %35 : vector<8x256xf32>
    %c40 = arith.constant 40 : index
    %c0_27 = arith.constant 0 : index
    %37 = vector.load %arg10[%c40, %c0_27] : memref<72x256xf32, #tpu.memory_space<vmem>>, vector<8x256xf32>
    tpu.vector_store %arg10[%c40, %c0_27], %36 {strides = array<i32>} : memref<72x256xf32, #tpu.memory_space<vmem>>, vector<8x256xf32>,
    %c0_28 = arith.constant 0 : index
    %c158 = arith.constant 158 : index
    %38 = vector.load %arg9[%c0_28, %c158] : memref<8x512xf32, #tpu.memory_space<vmem>>, vector<8x256xf32>
    %39 = vector.broadcast %16 : vector<1x256xf32> to vector<8x256xf32>
    %40 = arith.mulf %38, %39 : vector<8x256xf32>
    %c48 = arith.constant 48 : index
    %c0_29 = arith.constant 0 : index
    %41 = vector.load %arg10[%c48, %c0_29] : memref<72x256xf32, #tpu.memory_space<vmem>>, vector<8x256xf32>
    tpu.vector_store %arg10[%c48, %c0_29], %40 {strides = array<i32>} : memref<72x256xf32, #tpu.memory_space<vmem>>, vector<8x256xf32>,
    %c0_30 = arith.constant 0 : index
    %c160 = arith.constant 160 : index
    %42 = vector.load %arg9[%c0_30, %c160] : memref<8x512xf32, #tpu.memory_space<vmem>>, vector<8x256xf32>
    %c56 = arith.constant 56 : index
    %c0_31 = arith.constant 0 : index
    %43 = vector.load %arg10[%c56, %c0_31] : memref<72x256xf32, #tpu.memory_space<vmem>>, vector<8x256xf32>
    tpu.vector_store %arg10[%c56, %c0_31], %42 {strides = array<i32>} : memref<72x256xf32, #tpu.memory_space<vmem>>, vector<8x256xf32>,
    %c0_32 = arith.constant 0 : index
    %c162 = arith.constant 162 : index
    %44 = vector.load %arg9[%c0_32, %c162] : memref<8x512xf32, #tpu.memory_space<vmem>>, vector<8x256xf32>
    %45 = vector.broadcast %17 : vector<1x256xf32> to vector<8x256xf32>
    %46 = arith.mulf %44, %45 : vector<8x256xf32>
    %c64 = arith.constant 64 : index
    %c0_33 = arith.constant 0 : index
    %47 = vector.load %arg10[%c64, %c0_33] : memref<72x256xf32, #tpu.memory_space<vmem>>, vector<8x256xf32>
    tpu.vector_store %arg10[%c64, %c0_33], %46 {strides = array<i32>} : memref<72x256xf32, #tpu.memory_space<vmem>>, vector<8x256xf32>,
    %c0_34 = arith.constant 0 : index
    %c0_35 = arith.constant 0 : index
    %48 = vector.load %arg5[%c0_34, %c0_35] : memref<8x72xf32, #tpu.memory_space<vmem>>, vector<8x72xf32>
    %c0_36 = arith.constant 0 : index
    %c0_37 = arith.constant 0 : index
    %49 = vector.load %arg10[%c0_36, %c0_37] : memref<72x256xf32, #tpu.memory_space<vmem>>, vector<72x256xf32>
    %cst_38 = arith.constant dense<0.000000e+00> : vector<8x256xf32>
    %50 = tpu.matmul %48, %49, %cst_38 {dimension_numbers = #tpu.dot_dimension_numbers<[1], [0], [0], [1], [0, 0, 1, 1], [], []>} : vector<8x72xf32>, vector<72x256xf32>, vector<8x256xf32> -> vector<8x256xf32>
    %c0_39 = arith.constant 0 : index
    %c0_40 = arith.constant 0 : index
    %51 = vector.load %arg6[%c0_39, %c0_40] : memref<8x1xf32, #tpu.memory_space<vmem>>, vector<8x1xf32>
    %52 = vector.broadcast %51 : vector<8x1xf32> to vector<8x256xf32>
    %53 = arith.addf %50, %52 : vector<8x256xf32>
    %cst_41 = arith.constant 0.000000e+00 : f32
    %54 = vector.broadcast %cst_41 : f32 to vector<8x256xf32>
    %55 = arith.maximumf %53, %54 : vector<8x256xf32>
    %c0_42 = arith.constant 0 : index
    %c0_43 = arith.constant 0 : index
    %c0_44 = arith.constant 0 : index
    %56 = vector.load %arg8[%c0_42, %c0_43, %c0_44] : memref<1x8x256xf32, #tpu.memory_space<vmem>>, vector<1x8x256xf32>
    %57 = vector.shape_cast %56 : vector<1x8x256xf32> to vector<8x256xf32>
    %58 = vector.shape_cast %55 : vector<8x256xf32> to vector<1x8x256xf32>
    tpu.vector_store %arg8[%c0_42, %c0_43, %c0_44], %58 {strides = array<i32>} : memref<1x8x256xf32, #tpu.memory_space<vmem>>, vector<1x8x256xf32>,
    return
  }
  func.func @transform_0(%arg0: i32, %arg1: i32) -> (i32, i32, i32) {
    %c0_i32 = arith.constant 0 : i32
    %c0_i32_0 = arith.constant 0 : i32
    %c0_i32_1 = arith.constant 0 : i32
    return %arg0, %c0_i32, %c0_i32_0 : i32, i32, i32
  }
  func.func @transform_1(%arg0: i32, %arg1: i32) -> (i32, i32) {
    %c0_i32 = arith.constant 0 : i32
    %c0_i32_0 = arith.constant 0 : i32
    %c0_i32_1 = arith.constant 0 : i32
    return %c0_i32, %c0_i32_0 : i32, i32
  }
  func.func @transform_2(%arg0: i32, %arg1: i32) -> (i32, i32) {
    %c0_i32 = arith.constant 0 : i32
    %c0_i32_0 = arith.constant 0 : i32
    %c0_i32_1 = arith.constant 0 : i32
    return %c0_i32, %c0_i32_0 : i32, i32
  }
  func.func @transform_3(%arg0: i32, %arg1: i32) -> (i32, i32) {
    %c0_i32 = arith.constant 0 : i32
    %c0_i32_0 = arith.constant 0 : i32
    %c0_i32_1 = arith.constant 0 : i32
    return %c0_i32, %c0_i32_0 : i32, i32
  }
  func.func @transform_4(%arg0: i32, %arg1: i32) -> (i32, i32) {
    %c0_i32 = arith.constant 0 : i32
    %c0_i32_0 = arith.constant 0 : i32
    %c0_i32_1 = arith.constant 0 : i32
    return %c0_i32, %c0_i32_0 : i32, i32
  }
  func.func @transform_5(%arg0: i32, %arg1: i32) -> (i32, i32) {
    %c0_i32 = arith.constant 0 : i32
    %c0_i32_0 = arith.constant 0 : i32
    %c0_i32_1 = arith.constant 0 : i32
    return %c0_i32, %c0_i32_0 : i32, i32
  }
  func.func @transform_6(%arg0: i32, %arg1: i32) -> (i32, i32, i32) {
    %c0_i32 = arith.constant 0 : i32
    %c0_i32_0 = arith.constant 0 : i32
    return %arg0, %c0_i32, %arg1 : i32, i32, i32
  }
}

</mosaic_0001>

<llo_original>
// kernel: tpu_custom_call.1
$region0: #{tpu_custom_call.1}
  #allocation0 [shape = 'u32[]', space=smem, size = 0x4, offset = 0x4, fixed_abs, tag = 'smem constant byte address 0x4 - core index']
  #allocation1 [shape = 'u32[144,128]{1,0:T(1,128)}', space=vmem, size = 0x12000, scoped, tag = 'internal scratch']
  #allocation2 [shape = 'f32[8,512]{1,0:T(8,128)}', space=vmem, size = 0x4000, scoped, tag = 'scratch operand']
  #allocation3 [shape = 'f32[72,256]{1,0:T(8,128)}', space=vmem, size = 0x12000, scoped, tag = 'scratch operand']
  %s0 = inlined_call_operand.hbm [shape: f32[2,16,256], index: 0, kind: input, shape index: {}]
  %s1 = inlined_call_operand.vmem [shape: f32[8,16], index: 1, kind: input, shape index: {}]
  %s2 = inlined_call_operand.vmem [shape: f32[8,1], index: 2, kind: input, shape index: {}]
  %s3 = inlined_call_operand.vmem [shape: f32[8,72], index: 3, kind: input, shape index: {}]
  %s4 = inlined_call_operand.vmem [shape: f32[8,1], index: 4, kind: input, shape index: {}]
  %s5 = inlined_call_operand.vmem [shape: f32[2,256], index: 5, kind: input, shape index: {}]
  %s6 = inlined_call_operand.hbm [shape: f32[2,8,256], index: 6, kind: output, shape index: {}]
  %s7 = sld [smem:[#allocation0]]
  $region61: #{tpu_custom_call.1} parent=0
    _
  %s9 = ssub.s32 1, %s7
  %s10 = scalar_select 0, %s9, %s7
  $region1: #{tpu_custom_call.1} parent=0
    #allocation4 [shape = 'u8[32768]{0}', space=vmem, size = 0x8000, scoped, tag = 'input window, operand 0']
    #allocation5 [shape = 's32[2]{0}', space=sflag, size = 0x8, scoped, tag = 'scoped memory for tpu_custom_call.1']
    #allocation6 [shape = 's32[2]{0}', space=sflag, size = 0x8, scoped, tag = 'scoped memory for tpu_custom_call.1']
    #allocation7 [shape = 'u8[16384]{0}', space=vmem, size = 0x4000, scoped, tag = 'output window, operand 0']
    %11 = vsyncpa [#allocation5], 0
    %s12 = scalar_lea.sflag [#allocation5], 1
    %13 = vsyncpa %s12, 0
    %14 = vsyncpa [#allocation6], 0
    %s15 = scalar_lea.sflag [#allocation6], 1
    %16 = vsyncpa %s15, 0
    loop: start=0, step=1, limit=4
    $region2: #{tpu_custom_call.1} parent=1 // loop_pre_header
      _
    $region3: #{tpu_custom_call.1} parent=1 // loop_header
      %s18 = sphi 0, %s22
      %p19 = scmp.ge.s32.totalorder %s18, 4
      %s25 = sphi 0, %s37
      %s26 = sphi 0, %s33
      %s27 = sphi 0, %s25
      %s28 = sphi 0, %s26
      %s29 = sphi 0, %s27
      %s30 = sphi 0, %s28
      %s40 = sphi 0, %s42
      %s43 = sphi 0, %s40
      %s44 = sphi 0, %s43
      %s60 = sphi 0, %s44
      %s64 = sphi 0, %s64
      %s66 = sphi 0, %s64
      %s67 = sphi 0, %s66
      %s81 = sphi 0, %s67
      %s85 = sphi 0, %s85
      %s87 = sphi 0, %s85
      %s88 = sphi 0, %s87
      %s102 = sphi 0, %s88
      %s106 = sphi 0, %s106
      %s108 = sphi 0, %s106
      %s109 = sphi 0, %s108
      %s123 = sphi 0, %s109
      %s127 = sphi 0, %s127
      %s129 = sphi 0, %s127
      %s130 = sphi 0, %s129
      %s144 = sphi 0, %s130
      %s148 = sphi 0, %s148
      %s150 = sphi 0, %s148
      %s151 = sphi 0, %s150
      %s165 = sphi 0, %s151
      %s173 = sphi 0, %s175
      %s176 = sphi 0, %s173
      %s177 = sphi 0, %s176
      %s193 = sphi 0, %s177
    $region4: #{tpu_custom_call.1} parent=1 // loop_header_branch
      %21 = sbr.rel (%p19) target = $region8
    $region5: #{tpu_custom_call.1} parent=1 // loop_body
      %s23 = ssub.s32 %s18, 1
      %s24 = ssub.s32 %s18, 2
      %s31 = sadd.s32 1, %s26
      %p32 = scmp.ge.s32.totalorder %s31, 1
      %s33 = scalar_select %p32, 0, %s31
      %s34 = sadd.s32 1, %s25
      %s35 = scalar_select %p32, %s34, %s25
      %p36 = scmp.ge.s32.totalorder %s35, 2
      %s37 = scalar_select %p36, 0, %s35
      %s38 = ssub.s32 %s25, %s37
      %p39 = scmp.eq.s32.totalorder %s38, 0
      %s41 = sadd.s32 %s40, 1
      %s42 = scalar_select %p39, %s40, %s41
      %p45 = pneg %p39
      %p46 = scmp.eq.s32.totalorder %s18, 1
      %p47 = por %p45, %p46
      %p48 = scmp.ne.s32.totalorder %s40, %s43
      %p49 = scmp.eq.s32.totalorder %s18, 0
      %p50 = por %p48, %p49
      %p51 = scmp.ne.s32.totalorder %s40, %s43
      %p52 = scmp.eq.s32.totalorder %s23, 1
      %p53 = por %p51, %p52
      %p54 = scmp.ne.s32.totalorder %s43, %s44
      %p55 = scmp.eq.s32.totalorder %s23, 0
      %p56 = por %p54, %p55
      %p57 = scmp.ne.s32.totalorder %s43, %s44
      %p58 = scmp.eq.s32.totalorder %s24, 1
      %p59 = por %p57, %p58
      %p61 = scmp.ne.s32.totalorder %s44, %s60
      %p62 = scmp.eq.s32.totalorder %s24, 0
      %p63 = por %p61, %p62
      %s65 = sadd.s32 %s64, 1
      %p68 = scmp.eq.s32.totalorder %s18, 1
      %p69 = scmp.ne.s32.totalorder %s64, %s66
      %p70 = scmp.eq.s32.totalorder %s18, 0
      %p71 = por %p69, %p70
      %p72 = scmp.ne.s32.totalorder %s64, %s66
      %p73 = scmp.eq.s32.totalorder %s23, 1
      %p74 = por %p72, %p73
      %p75 = scmp.ne.s32.totalorder %s66, %s67
      %p76 = scmp.eq.s32.totalorder %s23, 0
      %p77 = por %p75, %p76
      %p78 = scmp.ne.s32.totalorder %s66, %s67
      %p79 = scmp.eq.s32.totalorder %s24, 1
      %p80 = por %p78, %p79
      %p82 = scmp.ne.s32.totalorder %s67, %s81
      %p83 = scmp.eq.s32.totalorder %s24, 0
      %p84 = por %p82, %p83
      %s86 = sadd.s32 %s85, 1
      %p89 = scmp.eq.s32.totalorder %s18, 1
      %p90 = scmp.ne.s32.totalorder %s85, %s87
      %p91 = scmp.eq.s32.totalorder %s18, 0
      %p92 = por %p90, %p91
      %p93 = scmp.ne.s32.totalorder %s85, %s87
      %p94 = scmp.eq.s32.totalorder %s23, 1
      %p95 = por %p93, %p94
      %p96 = scmp.ne.s32.totalorder %s87, %s88
      %p97 = scmp.eq.s32.totalorder %s23, 0
      %p98 = por %p96, %p97
      %p99 = scmp.ne.s32.totalorder %s87, %s88
      %p100 = scmp.eq.s32.totalorder %s24, 1
      %p101 = por %p99, %p100
      %p103 = scmp.ne.s32.totalorder %s88, %s102
      %p104 = scmp.eq.s32.totalorder %s24, 0
      %p105 = por %p103, %p104
      %s107 = sadd.s32 %s106, 1
      %p110 = scmp.eq.s32.totalorder %s18, 1
      %p111 = scmp.ne.s32.totalorder %s106, %s108
      %p112 = scmp.eq.s32.totalorder %s18, 0
      %p113 = por %p111, %p112
      %p114 = scmp.ne.s32.totalorder %s106, %s108
      %p115 = scmp.eq.s32.totalorder %s23, 1
      %p116 = por %p114, %p115
      %p117 = scmp.ne.s32.totalorder %s108, %s109
      %p118 = scmp.eq.s32.totalorder %s23, 0
      %p119 = por %p117, %p118
      %p120 = scmp.ne.s32.totalorder %s108, %s109
      %p121 = scmp.eq.s32.totalorder %s24, 1
      %p122 = por %p120, %p121
      %p124 = scmp.ne.s32.totalorder %s109, %s123
      %p125 = scmp.eq.s32.totalorder %s24, 0
      %p126 = por %p124, %p125
      %s128 = sadd.s32 %s127, 1
      %p131 = scmp.eq.s32.totalorder %s18, 1
      %p132 = scmp.ne.s32.totalorder %s127, %s129
      %p133 = scmp.eq.s32.totalorder %s18, 0
      %p134 = por %p132, %p133
      %p135 = scmp.ne.s32.totalorder %s127, %s129
      %p136 = scmp.eq.s32.totalorder %s23, 1
      %p137 = por %p135, %p136
      %p138 = scmp.ne.s32.totalorder %s129, %s130
      %p139 = scmp.eq.s32.totalorder %s23, 0
      %p140 = por %p138, %p139
      %p141 = scmp.ne.s32.totalorder %s129, %s130
      %p142 = scmp.eq.s32.totalorder %s24, 1
      %p143 = por %p141, %p142
      %p145 = scmp.ne.s32.totalorder %s130, %s144
      %p146 = scmp.eq.s32.totalorder %s24, 0
      %p147 = por %p145, %p146
      %s149 = sadd.s32 %s148, 1
      %p152 = scmp.eq.s32.totalorder %s18, 1
      %p153 = scmp.ne.s32.totalorder %s148, %s150
      %p154 = scmp.eq.s32.totalorder %s18, 0
      %p155 = por %p153, %p154
      %p156 = scmp.ne.s32.totalorder %s148, %s150
      %p157 = scmp.eq.s32.totalorder %s23, 1
      %p158 = por %p156, %p157
      %p159 = scmp.ne.s32.totalorder %s150, %s151
      %p160 = scmp.eq.s32.totalorder %s23, 0
      %p161 = por %p159, %p160
      %p162 = scmp.ne.s32.totalorder %s150, %s151
      %p163 = scmp.eq.s32.totalorder %s24, 1
      %p164 = por %p162, %p163
      %p166 = scmp.ne.s32.totalorder %s151, %s165
      %p167 = scmp.eq.s32.totalorder %s24, 0
      %p168 = por %p166, %p167
      %s169 = ssub.s32 %s25, %s37
      %s170 = ssub.s32 %s26, %s33
      %s171 = sor.u32 %s169, %s170
      %p172 = scmp.eq.s32.totalorder %s171, 0
      %s174 = sadd.s32 %s173, 1
      %s175 = scalar_select %p172, %s173, %s174
      %p178 = pneg %p172
      %p179 = scmp.eq.s32.totalorder %s18, 1
      %p180 = por %p178, %p179
      %p181 = scmp.ne.s32.totalorder %s173, %s176
      %p182 = scmp.eq.s32.totalorder %s18, 0
      %p183 = por %p181, %p182
      %p184 = scmp.ne.s32.totalorder %s173, %s176
      %p185 = scmp.eq.s32.totalorder %s23, 1
      %p186 = por %p184, %p185
      %p187 = scmp.ne.s32.totalorder %s176, %s177
      %p188 = scmp.eq.s32.totalorder %s23, 0
      %p189 = por %p187, %p188
      %p190 = scmp.ne.s32.totalorder %s176, %s177
      %p191 = scmp.eq.s32.totalorder %s24, 1
      %p192 = por %p190, %p191
      %p194 = scmp.ne.s32.totalorder %s177, %s193
      %p195 = scmp.eq.s32.totalorder %s24, 0
      %p196 = por %p194, %p195
      %p197 = scmp.le.s32.totalorder 1, %s18
      %p198 = scmp.lt.s32.totalorder %s18, 3
      %p199 = pnand %p197, %p198
      %p200 = pneg %p199
      // Predicated region
      $region9: #{tpu_custom_call.1} parent=5 // pred_check
        _
      $region10: #{tpu_custom_call.1} parent=5 // pred_check_branch
        %202 = sbr.rel (%p199) target = $region12
      $region11: #{tpu_custom_call.1} parent=5 // pred_region
        %s203 = ssub.s32 %s18, 1
        // Predicated region
        $region13: #{tpu_custom_call.1} parent=11 // pred_check
          %p204 = pneg %p77
        $region14: #{tpu_custom_call.1} parent=11 // pred_check_branch
          %206 = sbr.rel (%p204) target = $region16
        $region15: #{tpu_custom_call.1} parent=11 // pred_region
          _
        $region16: #{tpu_custom_call.1} parent=11 // pred_fallthru
          _
        // Predicated region
        $region17: #{tpu_custom_call.1} parent=11 // pred_check
          %p207 = pneg %p98
        $region18: #{tpu_custom_call.1} parent=11 // pred_check_branch
          %209 = sbr.rel (%p207) target = $region20
        $region19: #{tpu_custom_call.1} parent=11 // pred_region
          _
        $region20: #{tpu_custom_call.1} parent=11 // pred_fallthru
          _
        // Predicated region
        $region21: #{tpu_custom_call.1} parent=11 // pred_check
          %p210 = pneg %p119
        $region22: #{tpu_custom_call.1} parent=11 // pred_check_branch
          %212 = sbr.rel (%p210) target = $region24
        $region23: #{tpu_custom_call.1} parent=11 // pred_region
          _
        $region24: #{tpu_custom_call.1} parent=11 // pred_fallthru
          _
        // Predicated region
        $region25: #{tpu_custom_call.1} parent=11 // pred_check
          %p213 = pneg %p140
        $region26: #{tpu_custom_call.1} parent=11 // pred_check_branch
          %215 = sbr.rel (%p213) target = $region28
        $region27: #{tpu_custom_call.1} parent=11 // pred_region
          _
        $region28: #{tpu_custom_call.1} parent=11 // pred_fallthru
          _
        // Predicated region
        $region29: #{tpu_custom_call.1} parent=11 // pred_check
          %p216 = pneg %p161
        $region30: #{tpu_custom_call.1} parent=11 // pred_check_branch
          %218 = sbr.rel (%p216) target = $region32
        $region31: #{tpu_custom_call.1} parent=11 // pred_region
          _
        $region32: #{tpu_custom_call.1} parent=11 // pred_fallthru
          _
      $region12: #{tpu_custom_call.1} parent=5 // pred_fallthru
        _
      %p219 = scmp.lt.s32.totalorder %s18, 2
      // Predicated region
      $region33: #{tpu_custom_call.1} parent=5 // pred_check
        %p220 = pneg %p219
      $region34: #{tpu_custom_call.1} parent=5 // pred_check_branch
        %222 = sbr.rel (%p220) target = $region36
      $region35: #{tpu_custom_call.1} parent=5 // pred_region
        // Predicated region
        $region37: #{tpu_custom_call.1} parent=35 // pred_check
          %p223 = pneg %p50
        $region38: #{tpu_custom_call.1} parent=35 // pred_check_branch
          %225 = sbr.rel (%p223) target = $region40
        $region39: #{tpu_custom_call.1} parent=35 // pred_region
          %s226 = sand.u32 %s40, 1
          %s227 = scalar_lea.sflag [#allocation5], %s226
          %s228 = sand.u32 %s40, 1
          %s229 = smul.addr %s228, 32
          %s230 = scalar_lea.vmem [#allocation4], %s229
          %s232 = ssub.s32 512, 512
          %233 = vsyncadd %s227, %s232
          %s234 = smul.addr %s25, 4
          %s235 = smul.addr %s234, 128
          %s236 = scalar_lea.hbm %s0, %s235
          %s237 = sshll.u32 %s230, 4
          %s238 = int_to_ptr.vmem [resolvable:$true] %s237
          %243 = dma.hbm_to_vmem [thread:$0]  %s236, 512, %s238, %s227, 256, 256, 16
        $region40: #{tpu_custom_call.1} parent=35 // pred_fallthru
          _
      $region36: #{tpu_custom_call.1} parent=5 // pred_fallthru
        _
      %p244 = scmp.le.s32.totalorder 1, %s18
      %p245 = scmp.lt.s32.totalorder %s18, 3
      %p246 = pnand %p244, %p245
      %p247 = pneg %p246
      // Predicated region
      $region41: #{tpu_custom_call.1} parent=5 // pred_check
        _
      $region42: #{tpu_custom_call.1} parent=5 // pred_check_branch
        %249 = sbr.rel (%p246) target = $region44
      $region43: #{tpu_custom_call.1} parent=5 // pred_region
        %s250 = ssub.s32 %s18, 1
        %s251 = sand.u32 %s43, 1
        %s252 = scalar_lea.sflag [#allocation5], %s251
        %s253 = sand.u32 %s43, 1
        %s254 = smul.addr %s253, 32
        %s255 = scalar_lea.vmem [#allocation4], %s254
        // Predicated region
        $region45: #{tpu_custom_call.1} parent=43 // pred_check
          %p256 = pneg %p56
        $region46: #{tpu_custom_call.1} parent=43 // pred_check_branch
          %258 = sbr.rel (%p256) target = $region48
        $region47: #{tpu_custom_call.1} parent=43 // pred_region
          %259 = dma.done %s252, 512
        $region48: #{tpu_custom_call.1} parent=43 // pred_fallthru
          _
        %s260 = sand.u32 %s43, 1
        %s261 = scalar_lea.sflag [#allocation5], %s260
        %s262 = sand.u32 %s43, 1
        %s263 = smul.addr %s262, 32
        %s264 = scalar_lea.vmem [#allocation4], %s263
        %p265 = pneg %p56
        %p266 = pneg %p53
        %p267 = pneg %p77
        %p268 = pneg %p74
        %p269 = pneg %p98
        %p270 = pneg %p95
        %p271 = pneg %p119
        %p272 = pneg %p116
        %p273 = pneg %p140
        %p274 = pneg %p137
        %p275 = pneg %p161
        %p276 = pneg %p158
        %p277 = pneg %p189
        %p278 = pneg %p186
        %s279 = sand.u32 %s176, 1
        %s280 = scalar_lea.sflag [#allocation6], %s279
        %s281 = sand.u32 %s176, 1
        %s282 = smul.addr %s281, 16
        %s283 = scalar_lea.vmem [#allocation7], %s282
        %s284 = smul.u32 2, %s28
        %s285 = smul.u32 %s28, 256
        %v286 = vld [vmem:[%s1] sm:$0xff]
        %v287 = vld [vmem:[%s2] sm:$0xff]
        %288 = vst [vmem:[#allocation2] sm:$0xff] 0.0
        %289 = vst [vmem:[#allocation2 + $0x18] sm:$0xff] 0.0
        %s290 = sshra.s32 %s285, 7
        %s291 = sand.u32 %s285, 127
        %s292 = smul.addr %s290, 8
        %s293 = scalar_lea.vmem %s255, %s292 [#allocation4]
        %v294 = vld [vmem:[%s293] sm:$0xff]
        %v295 = vld [vmem:[%s293 + $0x8] sm:$0xff]
        %v296 = vld [vmem:[%s293 + $0x10] sm:$0xff]
        %v297 = vld [vmem:[%s293 + $0x18] sm:$0xff]
        %299 = vset.pattern.permute.xlu0 0
        %300 = vperm.xlu0 %299, %v287
        %v301 = vpop.permute.xlu0 %300
        %vm303 = vcmask 130048
        %v305 = vsel %vm303, %v286, 0
        %307 = vmatprep.subr.mxu0 0.0
        %308 = vmatpush1.msra.mxu0 0.0
        %309 = vmatprep.subr.mxu0 0.0
        %310 = vmatpush1.msra.mxu0 0.0
        %311 = vmatprep.subr.mxu0 0.0
        %312 = vmatpush1.msra.mxu0 0.0
        %313 = vmatprep.subr.mxu0 0.0
        %314 = vmatpush1.msra.mxu0 0.0
        %315 = vmatprep.subr.mxu0 0.0
        %316 = vmatpush1.msra.mxu0 0.0
        %317 = vmatprep.subr.mxu0 0.0
        %318 = vmatpush1.msra.mxu0 0.0
        %319 = vmatprep.subr.mxu0 0.0
        %320 = vmatpush1.msra.mxu0 0.0
        %321 = vmatprep.subr.mxu0 0.0
        %322 = vmatpush1.msra.mxu0 0.0
        %323 = vmatprep.subr.mxu0 0.0
        %324 = vmatpush1.msra.mxu0 0.0
        %325 = vmatprep.subr.mxu0 0.0
        %326 = vmatpush1.msra.mxu0 0.0
        %327 = vmatprep.subr.mxu0 0.0
        %328 = vmatpush1.msra.mxu0 0.0
        %329 = vmatprep.subr.mxu0 0.0
        %330 = vmatpush1.msra.mxu0 0.0
        %331 = vmatprep.subr.mxu0 0.0
        %332 = vmatpush1.msra.mxu0 0.0
        %333 = vmatprep.subr.mxu0 0.0
        %334 = vmatpush1.msra.mxu0 0.0
        %335 = vmatprep.subr.mxu0 %v297
        %336 = vmatpush1.msra.mxu0 %v296
        %337 = vmatprep.subr.mxu0 %v295
        %338 = vmatpush1.msra.mxu0 %v294
        %339 = vmatprep.subr.mxu0 0.0
        %340 = vmatpush2.msra.mxu0 0.0
        %341 = vmatprep.subr.mxu0 0.0
        %342 = vmatpush2.msra.mxu0 0.0
        %343 = vmatprep.subr.mxu0 0.0
        %344 = vmatpush2.msra.mxu0 0.0
        %345 = vmatprep.subr.mxu0 0.0
        %346 = vmatpush2.msra.mxu0 0.0
        %347 = vmatprep.subr.mxu0 0.0
        %348 = vmatpush2.msra.mxu0 0.0
        %349 = vmatprep.subr.mxu0 0.0
        %350 = vmatpush2.msra.mxu0 0.0
        %351 = vmatprep.subr.mxu0 0.0
        %352 = vmatpush2.msra.mxu0 0.0
        %353 = vmatprep.subr.mxu0 0.0
        %354 = vmatpush2.msra.mxu0 0.0
        %355 = vmatprep.subr.mxu0 0.0
        %356 = vmatpush2.msra.mxu0 0.0
        %357 = vmatprep.subr.mxu0 0.0
        %358 = vmatpush2.msra.mxu0 0.0
        %359 = vmatprep.subr.mxu0 0.0
        %360 = vmatpush2.msra.mxu0 0.0
        %361 = vmatprep.subr.mxu0 0.0
        %362 = vmatpush2.msra.mxu0 0.0
        %363 = vmatprep.subr.mxu0 0.0
        %364 = vmatpush2.msra.mxu0 0.0
        %365 = vmatprep.subr.mxu0 0.0
        %366 = vmatpush2.msra.mxu0 0.0
        %367 = vmatprep.subr.mxu0 0.0
        %368 = vmatpush2.msra.mxu0 0.0
        %369 = vmatprep.subr.mxu0 0.0
        %370 = vmatpush2.msra.mxu0 0.0
        %371 = vmatprep.mubr.f32.mxu0 0.0
        %372 = vmatmul.mubr.f32.gmra.mxu0 %v305
        %v373 = vpop.f32.mrf.mxu0
        %v374 = vadd.f32 %v301, %v373
        %v375 = vpop.f32.mrf.mxu0
        %v376 = vadd.f32 %v301, %v375
        %377 = vdwg.mxu0
        %v378 = vmax.f32 %v374, 0.0
        %v379 = vmax.f32 %v376, 0.0
        %380 = vst [vmem:[#allocation2 + $0x8] sm:$0xff] %v378
        %381 = vst [vmem:[#allocation2 + $0x10] sm:$0xff] %v379
        %v382 = vld [vmem:[%s5] ss:$2 sm:$0x3]
        %s383 = scalar_lea.vmem %s5, 1
        %v384 = vld [vmem:[%s383] ss:$2 sm:$0x3]
        %v385 = vld [vmem:[#allocation2] sm:$0xff]
        %v386 = vld [vmem:[#allocation2 + $0x8] sm:$0xff]
        %v387 = vld [vmem:[#allocation2 + $0x10] sm:$0xff]
        %v389 = vlaneseq
        %v390 = vshrl.u32 %v389, 7
        %v391 = vsub.s32 0, %v390
        %v392 = vrot.slane %v382, %v391
        %v393 = vlaneseq
        %v394 = vshrl.u32 %v393, 7
        %v395 = vsub.s32 1, %v394
        %v396 = vrot.slane %v382, %v395
        %397 = vrot.lane.b32.xlu0 %v392, 94
        %v398 = vpop.permute.xlu0 %397
        %399 = vrot.lane.b32.xlu0 %v396, 94
        %v400 = vpop.permute.xlu0 %399
        %vm401 = vcmask 769024
        %v402 = vsel %vm401, %v398, %v400
        %v406 = vmul.f32 %v385, %v398
        %v407 = vmul.f32 %v386, %v402
        %v408 = vmul.f32 %v387, %v400
        %412 = vrot.lane.b32.xlu0 %v406, 34
        %v413 = vpop.permute.xlu0 %412
        %414 = vrot.lane.b32.xlu0 %v407, 34
        %v415 = vpop.permute.xlu0 %414
        %416 = vrot.lane.b32.xlu0 %v408, 34
        %v417 = vpop.permute.xlu0 %416
        %vm418 = vcmask 277504
        %v419 = vsel %vm418, %v413, %v415
        %v420 = vsel %vm418, %v415, %v417
        %423 = vst [vmem:[#allocation3] sm:$0xff] %v419
        %424 = vst [vmem:[#allocation3 + $0x8] sm:$0xff] %v420
        %v425 = vld [vmem:[#allocation2] sm:$0xff]
        %v426 = vld [vmem:[#allocation2 + $0x8] sm:$0xff]
        %v427 = vld [vmem:[#allocation2 + $0x10] sm:$0xff]
        %431 = vrot.lane.b32.xlu0 %v425, 32
        %v432 = vpop.permute.xlu0 %431
        %433 = vrot.lane.b32.xlu0 %v426, 32
        %v434 = vpop.permute.xlu0 %433
        %435 = vrot.lane.b32.xlu0 %v427, 32
        %v436 = vpop.permute.xlu0 %435
        %vm437 = vcmask 261120
        %v438 = vsel %vm437, %v432, %v434
        %v439 = vsel %vm437, %v434, %v436
        %442 = vst [vmem:[#allocation3 + $0x10] sm:$0xff] %v438
        %443 = vst [vmem:[#allocation3 + $0x18] sm:$0xff] %v439
        %v444 = vld [vmem:[#allocation2] sm:$0xff]
        %v445 = vld [vmem:[#allocation2 + $0x8] sm:$0xff]
        %v446 = vld [vmem:[#allocation2 + $0x10] sm:$0xff]
        %v448 = vlaneseq
        %v449 = vshrl.u32 %v448, 7
        %v450 = vsub.s32 0, %v449
        %v451 = vrot.slane %v384, %v450
        %v452 = vlaneseq
        %v453 = vshrl.u32 %v452, 7
        %v454 = vsub.s32 1, %v453
        %v455 = vrot.slane %v384, %v454
        %456 = vrot.lane.b32.xlu0 %v451, 98
        %v457 = vpop.permute.xlu0 %456
        %458 = vrot.lane.b32.xlu0 %v455, 98
        %v459 = vpop.permute.xlu0 %458
        %vm460 = vcmask 801792
        %v461 = vsel %vm460, %v457, %v459
        %v465 = vmul.f32 %v444, %v457
        %v466 = vmul.f32 %v445, %v461
        %v467 = vmul.f32 %v446, %v459
        %471 = vrot.lane.b32.xlu0 %v465, 30
        %v472 = vpop.permute.xlu0 %471
        %473 = vrot.lane.b32.xlu0 %v466, 30
        %v474 = vpop.permute.xlu0 %473
        %475 = vrot.lane.b32.xlu0 %v467, 30
        %v476 = vpop.permute.xlu0 %475
        %vm477 = vcmask 244736
        %v478 = vsel %vm477, %v472, %v474
        %v479 = vsel %vm477, %v474, %v476
        %482 = vst [vmem:[#allocation3 + $0x20] sm:$0xff] %v478
        %483 = vst [vmem:[#allocation3 + $0x28] sm:$0xff] %v479
        %v484 = vld [vmem:[#allocation2] sm:$0xff]
        %v485 = vld [vmem:[#allocation2 + $0x8] sm:$0xff]
        %v486 = vld [vmem:[#allocation2 + $0x10] sm:$0xff]
        %487 = vrot.lane.b32.xlu0 %v392, 126
        %v488 = vpop.permute.xlu0 %487
        %489 = vrot.lane.b32.xlu0 %v396, 126
        %v490 = vpop.permute.xlu0 %489
        %vm491 = vcmask 1031168
        %v492 = vsel %vm491, %v488, %v490
        %v496 = vmul.f32 %v484, %v488
        %v497 = vmul.f32 %v485, %v492
        %v498 = vmul.f32 %v486, %v490
        %502 = vrot.lane.b32.xlu0 %v496, 2
        %v503 = vpop.permute.xlu0 %502
        %504 = vrot.lane.b32.xlu0 %v497, 2
        %v505 = vpop.permute.xlu0 %504
        %506 = vrot.lane.b32.xlu0 %v498, 2
        %v507 = vpop.permute.xlu0 %506
        %vm508 = vcmask 15360
        %v509 = vsel %vm508, %v503, %v505
        %v510 = vsel %vm508, %v505, %v507
        %513 = vst [vmem:[#allocation3 + $0x30] sm:$0xff] %v509
        %514 = vst [vmem:[#allocation3 + $0x38] sm:$0xff] %v510
        %v515 = vld [vmem:[#allocation2 + $0x8] sm:$0xff]
        %v516 = vld [vmem:[#allocation2 + $0x10] sm:$0xff]
        %517 = vst [vmem:[#allocation3 + $0x40] sm:$0xff] %v515
        %518 = vst [vmem:[#allocation3 + $0x48] sm:$0xff] %v516
        %v519 = vld [vmem:[#allocation2 + $0x8] sm:$0xff]
        %v520 = vld [vmem:[#allocation2 + $0x10] sm:$0xff]
        %v521 = vld [vmem:[#allocation2 + $0x18] sm:$0xff]
        %522 = vrot.lane.b32.xlu0 %v451, 2
        %v523 = vpop.permute.xlu0 %522
        %524 = vrot.lane.b32.xlu0 %v455, 2
        %v525 = vpop.permute.xlu0 %524
        %v526 = vsel %vm508, %v523, %v525
        %v530 = vmul.f32 %v519, %v523
        %v531 = vmul.f32 %v520, %v526
        %v532 = vmul.f32 %v521, %v525
        %536 = vrot.lane.b32.xlu0 %v530, 126
        %v537 = vpop.permute.xlu0 %536
        %538 = vrot.lane.b32.xlu0 %v531, 126
        %v539 = vpop.permute.xlu0 %538
        %540 = vrot.lane.b32.xlu0 %v532, 126
        %v541 = vpop.permute.xlu0 %540
        %v542 = vsel %vm491, %v537, %v539
        %v543 = vsel %vm491, %v539, %v541
        %546 = vst [vmem:[#allocation3 + $0x50] sm:$0xff] %v542
        %547 = vst [vmem:[#allocation3 + $0x58] sm:$0xff] %v543
        %v548 = vld [vmem:[#allocation2 + $0x8] sm:$0xff]
        %v549 = vld [vmem:[#allocation2 + $0x10] sm:$0xff]
        %v550 = vld [vmem:[#allocation2 + $0x18] sm:$0xff]
        %551 = vrot.lane.b32.xlu0 %v392, 30
        %v552 = vpop.permute.xlu0 %551
        %553 = vrot.lane.b32.xlu0 %v396, 30
        %v554 = vpop.permute.xlu0 %553
        %v555 = vsel %vm477, %v552, %v554
        %v559 = vmul.f32 %v548, %v552
        %v560 = vmul.f32 %v549, %v555
        %v561 = vmul.f32 %v550, %v554
        %565 = vrot.lane.b32.xlu0 %v559, 98
        %v566 = vpop.permute.xlu0 %565
        %567 = vrot.lane.b32.xlu0 %v560, 98
        %v568 = vpop.permute.xlu0 %567
        %569 = vrot.lane.b32.xlu0 %v561, 98
        %v570 = vpop.permute.xlu0 %569
        %v571 = vsel %vm460, %v566, %v568
        %v572 = vsel %vm460, %v568, %v570
        %575 = vst [vmem:[#allocation3 + $0x60] sm:$0xff] %v571
        %576 = vst [vmem:[#allocation3 + $0x68] sm:$0xff] %v572
        %v577 = vld [vmem:[#allocation2 + $0x8] sm:$0xff]
        %v578 = vld [vmem:[#allocation2 + $0x10] sm:$0xff]
        %v579 = vld [vmem:[#allocation2 + $0x18] sm:$0xff]
        %583 = vrot.lane.b32.xlu0 %v577, 96
        %v584 = vpop.permute.xlu0 %583
        %585 = vrot.lane.b32.xlu0 %v578, 96
        %v586 = vpop.permute.xlu0 %585
        %587 = vrot.lane.b32.xlu0 %v579, 96
        %v588 = vpop.permute.xlu0 %587
        %vm589 = vcmask 785408
        %v590 = vsel %vm589, %v584, %v586
        %v591 = vsel %vm589, %v586, %v588
        %594 = vst [vmem:[#allocation3 + $0x70] sm:$0xff] %v590
        %595 = vst [vmem:[#allocation3 + $0x78] sm:$0xff] %v591
        %v596 = vld [vmem:[#allocation2 + $0x8] sm:$0xff]
        %v597 = vld [vmem:[#allocation2 + $0x10] sm:$0xff]
        %v598 = vld [vmem:[#allocation2 + $0x18] sm:$0xff]
        %599 = vrot.lane.b32.xlu0 %v451, 34
        %v600 = vpop.permute.xlu0 %599
        %601 = vrot.lane.b32.xlu0 %v455, 34
        %v602 = vpop.permute.xlu0 %601
        %v603 = vsel %vm418, %v600, %v602
        %v607 = vmul.f32 %v596, %v600
        %v608 = vmul.f32 %v597, %v603
        %v609 = vmul.f32 %v598, %v602
        %613 = vrot.lane.b32.xlu0 %v607, 94
        %v614 = vpop.permute.xlu0 %613
        %615 = vrot.lane.b32.xlu0 %v608, 94
        %v616 = vpop.permute.xlu0 %615
        %617 = vrot.lane.b32.xlu0 %v609, 94
        %v618 = vpop.permute.xlu0 %617
        %v619 = vsel %vm401, %v614, %v616
        %v620 = vsel %vm401, %v616, %v618
        %623 = vst [vmem:[#allocation3 + $0x80] sm:$0xff] %v619
        %624 = vst [vmem:[#allocation3 + $0x88] sm:$0xff] %v620
        %v625 = vld [vmem:[%s3] sm:$0xff]
        %v626 = vld [vmem:[#allocation3] sm:$0xff]
        %v627 = vld [vmem:[#allocation3 + $0x8] sm:$0xff]
        %v628 = vld [vmem:[#allocation3 + $0x10] sm:$0xff]
        %v629 = vld [vmem:[#allocation3 + $0x18] sm:$0xff]
        %v630 = vld [vmem:[#allocation3 + $0x20] sm:$0xff]
        %v631 = vld [vmem:[#allocation3 + $0x28] sm:$0xff]
        %v632 = vld [vmem:[#allocation3 + $0x30] sm:$0xff]
        %v633 = vld [vmem:[#allocation3 + $0x38] sm:$0xff]
        %v634 = vld [vmem:[#allocation3 + $0x40] sm:$0xff]
        %v635 = vld [vmem:[#allocation3 + $0x48] sm:$0xff]
        %v636 = vld [vmem:[#allocation3 + $0x50] sm:$0xff]
        %v637 = vld [vmem:[#allocation3 + $0x58] sm:$0xff]
        %v638 = vld [vmem:[#allocation3 + $0x60] sm:$0xff]
        %v639 = vld [vmem:[#allocation3 + $0x68] sm:$0xff]
        %v640 = vld [vmem:[#allocation3 + $0x70] sm:$0xff]
        %v641 = vld [vmem:[#allocation3 + $0x78] sm:$0xff]
        %v642 = vld [vmem:[#allocation3 + $0x80] sm:$0xff]
        %v643 = vld [vmem:[#allocation3 + $0x88] sm:$0xff]
        %v644 = vld [vmem:[%s4] sm:$0xff]
        %646 = vset.pattern.permute.xlu0 0
        %647 = vperm.xlu0 %646, %v644
        %v648 = vpop.permute.xlu0 %647
        %vm650 = vcmask 588800
        %v652 = vsel %vm650, %v625, 0
        %654 = vmatprep.subr.mxu0 0.0
        %655 = vmatpush1.msra.mxu0 0.0
        %656 = vmatprep.subr.mxu0 0.0
        %657 = vmatpush1.msra.mxu0 0.0
        %658 = vmatprep.subr.mxu0 0.0
        %659 = vmatpush1.msra.mxu0 0.0
        %660 = vmatprep.subr.mxu0 0.0
        %661 = vmatpush1.msra.mxu0 0.0
        %662 = vmatprep.subr.mxu0 0.0
        %663 = vmatpush1.msra.mxu0 0.0
        %664 = vmatprep.subr.mxu0 0.0
        %665 = vmatpush1.msra.mxu0 0.0
        %666 = vmatprep.subr.mxu0 0.0
        %667 = vmatpush1.msra.mxu0 0.0
        %668 = vmatprep.subr.mxu0 %v643
        %669 = vmatpush1.msra.mxu0 %v642
        %670 = vmatprep.subr.mxu0 %v641
        %671 = vmatpush1.msra.mxu0 %v640
        %672 = vmatprep.subr.mxu0 %v639
        %673 = vmatpush1.msra.mxu0 %v638
        %674 = vmatprep.subr.mxu0 %v637
        %675 = vmatpush1.msra.mxu0 %v636
        %676 = vmatprep.subr.mxu0 %v635
        %677 = vmatpush1.msra.mxu0 %v634
        %678 = vmatprep.subr.mxu0 %v633
        %679 = vmatpush1.msra.mxu0 %v632
        %680 = vmatprep.subr.mxu0 %v631
        %681 = vmatpush1.msra.mxu0 %v630
        %682 = vmatprep.subr.mxu0 %v629
        %683 = vmatpush1.msra.mxu0 %v628
        %684 = vmatprep.subr.mxu0 %v627
        %685 = vmatpush1.msra.mxu0 %v626
        %686 = vmatprep.subr.mxu0 0.0
        %687 = vmatpush2.msra.mxu0 0.0
        %688 = vmatprep.subr.mxu0 0.0
        %689 = vmatpush2.msra.mxu0 0.0
        %690 = vmatprep.subr.mxu0 0.0
        %691 = vmatpush2.msra.mxu0 0.0
        %692 = vmatprep.subr.mxu0 0.0
        %693 = vmatpush2.msra.mxu0 0.0
        %694 = vmatprep.subr.mxu0 0.0
        %695 = vmatpush2.msra.mxu0 0.0
        %696 = vmatprep.subr.mxu0 0.0
        %697 = vmatpush2.msra.mxu0 0.0
        %698 = vmatprep.subr.mxu0 0.0
        %699 = vmatpush2.msra.mxu0 0.0
        %700 = vmatprep.subr.mxu0 0.0
        %701 = vmatpush2.msra.mxu0 0.0
        %702 = vmatprep.subr.mxu0 0.0
        %703 = vmatpush2.msra.mxu0 0.0
        %704 = vmatprep.subr.mxu0 0.0
        %705 = vmatpush2.msra.mxu0 0.0
        %706 = vmatprep.subr.mxu0 0.0
        %707 = vmatpush2.msra.mxu0 0.0
        %708 = vmatprep.subr.mxu0 0.0
        %709 = vmatpush2.msra.mxu0 0.0
        %710 = vmatprep.subr.mxu0 0.0
        %711 = vmatpush2.msra.mxu0 0.0
        %712 = vmatprep.subr.mxu0 0.0
        %713 = vmatpush2.msra.mxu0 0.0
        %714 = vmatprep.subr.mxu0 0.0
        %715 = vmatpush2.msra.mxu0 0.0
        %716 = vmatprep.subr.mxu0 0.0
        %717 = vmatpush2.msra.mxu0 0.0
        %718 = vmatprep.mubr.f32.mxu0 0.0
        %719 = vmatmul.mubr.f32.gmra.mxu0 %v652
        %v720 = vpop.f32.mrf.mxu0
        %v721 = vadd.f32 %v648, %v720
        %v722 = vpop.f32.mrf.mxu0
        %v723 = vadd.f32 %v648, %v722
        %724 = vdwg.mxu0
        %v725 = vmax.f32 %v721, 0.0
        %v726 = vmax.f32 %v723, 0.0
        %727 = vst [vmem:[%s283] sm:$0xff] %v725
        %728 = vst [vmem:[%s283 + $0x8] sm:$0xff] %v726
        %s729 = sand.u32 %s176, 1
        %s730 = scalar_lea.sflag [#allocation6], %s729
        %s731 = sand.u32 %s176, 1
        %s732 = smul.addr %s731, 16
        %s733 = scalar_lea.vmem [#allocation7], %s732
        // Predicated region
        $region49: #{tpu_custom_call.1} parent=43 // pred_check
          %p734 = pneg %p186
        $region50: #{tpu_custom_call.1} parent=43 // pred_check_branch
          %736 = sbr.rel (%p734) target = $region52
        $region51: #{tpu_custom_call.1} parent=43 // pred_region
          %s737 = smul.u32 2, %s28
          %s739 = ssub.s32 256, 256
          %740 = vsyncadd %s730, %s739
          %s741 = smul.addr %s27, 2
          %s742 = sadd.s32 %s737, %s741
          %s743 = smul.addr %s742, 128
          %s744 = scalar_lea.hbm %s6, %s743
          %s746 = sshll.u32 %s733, 4
          %s747 = int_to_ptr.vmem [resolvable:$true] %s746
          %749 = dma.vmem_to_hbm [thread:$0]  %s747, 256, %s744, %s730
        $region52: #{tpu_custom_call.1} parent=43 // pred_fallthru
          _
      $region44: #{tpu_custom_call.1} parent=5 // pred_fallthru
        _
      %p750 = scmp.le.s32.totalorder 2, %s18
      // Predicated region
      $region53: #{tpu_custom_call.1} parent=5 // pred_check
        %p751 = pneg %p750
      $region54: #{tpu_custom_call.1} parent=5 // pred_check_branch
        %753 = sbr.rel (%p751) target = $region56
      $region55: #{tpu_custom_call.1} parent=5 // pred_region
        %s754 = ssub.s32 %s18, 2
        // Predicated region
        $region57: #{tpu_custom_call.1} parent=55 // pred_check
          %p755 = pneg %p192
        $region58: #{tpu_custom_call.1} parent=55 // pred_check_branch
          %757 = sbr.rel (%p755) target = $region60
        $region59: #{tpu_custom_call.1} parent=55 // pred_region
          %s758 = sand.u32 %s177, 1
          %s759 = scalar_lea.sflag [#allocation6], %s758
          %s760 = sand.u32 %s177, 1
          %s761 = smul.addr %s760, 16
          %s762 = scalar_lea.vmem [#allocation7], %s761
          %763 = dma.done %s759, 256
        $region60: #{tpu_custom_call.1} parent=55 // pred_fallthru
          _
      $region56: #{tpu_custom_call.1} parent=5 // pred_fallthru
        _
    $region6: #{tpu_custom_call.1} parent=1 // loop_footer
      %s22 = sadd.s32 1, %s18
    $region7: #{tpu_custom_call.1} parent=1 // loop_footer_branch
      %17 = sbr.rel target = $region3
    $region8: #{tpu_custom_call.1} parent=1 // loop_exit
      _
    %764 = vsyncpa [#allocation5], 1
    %s765 = scalar_lea.sflag [#allocation5], 1
    %766 = vsyncpa %s765, 1
    %767 = vsyncpa [#allocation6], 1
    %s768 = scalar_lea.sflag [#allocation6], 1
    %769 = vsyncpa %s768, 1

</llo_original>
